<compile_context>
chip_gen: v5e
topology: v5e:2x2
jax: 0.10.0
libtpu: 0.0.40
codegen_flags: <defaults>
</compile_context>

<pallas_src>
import jax
import jax.numpy as jnp
from jax.experimental import pallas as pl
from jax.experimental.pallas import tpu as pltpu

HIDDEN_SIZE = 64


def _round_up(n, m):
    return ((n + m - 1) // m) * m


def lstm_fused_kernel(x_ref, wih_ref, whh_ref, bias_ref, h_ref):
    """Fused input projection + serial LSTM recurrence for one batch tile.

    x_ref:    (TB, T*I) f32   raw inputs, lane-dense (time*feature on lanes)
    wih_ref:  (I, 4H)   f32   input->gates weight (transposed vs. PyTorch)
    whh_ref:  (H, 4H)   bf16  hidden->gates weight (transposed vs. PyTorch)
    bias_ref: (1, 4H)   f32   b_ih + b_hh
    h_ref:    (TB, H)   f32   last hidden state (output)
    """
    TB = x_ref.shape[0]
    I = wih_ref.shape[0]
    T = x_ref.shape[1] // I
    H = whh_ref.shape[0]

    bias = bias_ref[...]                              # (1, 4H), tiny, resident
    h = jnp.zeros((TB, H), jnp.float32)
    c = jnp.zeros((TB, H), jnp.float32)

    # T is small and static: a plain Python loop fully unrolls the recurrence
    # (live state is just h/c), keeping every index static and giving the
    # scheduler cross-timestep visibility.  The x-projection of step t has no
    # dependence on h, so the scheduler can overlap it with the previous
    # step's elementwise chain.
    for t in range(T):
        if I == 1:
            # Outer-product form: avoids a K=1 MXU pass.
            gx = x_ref[:, t:t + 1] * wih_ref[...]                    # (TB, 4H)
        else:
            gx = jnp.dot(x_ref[:, t * I:(t + 1) * I], wih_ref[...],
                         preferred_element_type=jnp.float32)         # (TB, 4H)
        # Hidden projection on the MXU in bf16, f32 accumulate.  whh is
        # pulled from VMEM each step (not pinned) to keep vregs for gates.
        gh = jnp.dot(h.astype(jnp.bfloat16), whh_ref[...],
                     preferred_element_type=jnp.float32)              # (TB, 4H)
        gates = gx + gh + bias

        # One full-width sigmoid over all 4H lanes (EUP slot); tanh only on g.
        sig = jax.nn.sigmoid(gates)
        i_g = sig[:, 0 * H:1 * H]
        f_g = sig[:, 1 * H:2 * H]
        o_g = sig[:, 3 * H:4 * H]
        g_g = jnp.tanh(gates[:, 2 * H:3 * H])
        c = f_g * c + i_g * g_g
        h = o_g * jnp.tanh(c)

    h_ref[...] = h.astype(h_ref.dtype)


def lstm_model_forward(x, wih, whh, b_ih, b_hh, wlin, blin):
    """LSTMModel.forward: x (B, T, I) batch_first, weights in PyTorch layouts."""
    B, T, I = x.shape
    H = whh.shape[1]

    # Batch tile selection: multiple of 8, up to 128 (fills the MXU M dim
    # without blowing vregs); when batch allows, keep >= 2 grid blocks so the
    # "parallel" axis can shard across TensorCores (v7x megacore).
    B8 = _round_up(B, 8)
    if B8 >= 16:
        TB = min(128, _round_up(B8 // 2, 8))
    else:
        TB = B8
    B_pad = _round_up(B, TB)
    grid = (B_pad // TB,)

    # Lane-dense 2D view of the raw input; pad batch with zero rows (padded
    # rows are independent and dropped after the kernel).
    x2d = x.astype(jnp.float32).reshape(B, T * I)
    if B_pad != B:
        x2d = jnp.pad(x2d, ((0, B_pad - B), (0, 0)))

    wih_t = wih.T.astype(jnp.float32)                 # (I, 4H)
    whh_t = whh.T.astype(jnp.bfloat16)                # (H, 4H), bf16 for MXU
    bias = (b_ih + b_hh).astype(jnp.float32).reshape(1, 4 * H)

    # Advisory cost estimate for XLA's scheduler.
    flops = B_pad * T * (2 * I * 4 * H + 2 * H * 4 * H + 10 * H)
    transcendentals = B_pad * T * (4 * H + 2 * H)
    bytes_accessed = (x2d.size * 4 + wih_t.size * 4 + whh_t.size * 2
                      + bias.size * 4 + B_pad * H * 4)

    h_last = pl.pallas_call(
        lstm_fused_kernel,
        out_shape=jax.ShapeDtypeStruct((B_pad, H), jnp.float32),
        grid=grid,
        in_specs=[
            pl.BlockSpec((TB, T * I), lambda b: (b, 0)),
            pl.BlockSpec((I, 4 * H), lambda b: (0, 0)),
            pl.BlockSpec((H, 4 * H), lambda b: (0, 0)),
            pl.BlockSpec((1, 4 * H), lambda b: (0, 0)),
        ],
        out_specs=pl.BlockSpec((TB, H), lambda b: (b, 0)),
        compiler_params=pltpu.CompilerParams(
            dimension_semantics=("parallel",)),
        cost_estimate=pl.CostEstimate(
            flops=flops, transcendentals=transcendentals,
            bytes_accessed=bytes_accessed),
    )(x2d, wih_t, whh_t, bias)

    h_last = h_last[:B]
    # Final Linear on the last hidden state (tiny (B,H)@(H,1); left to XLA).
    return h_last @ wlin.T.astype(jnp.float32) + blin.astype(jnp.float32)


def ref_forward(x, wih, whh, b_ih, b_hh, wlin, blin):
    """Pure-JAX f32 reference matching torch.nn.LSTM(batch_first=True) + Linear."""
    B, T, I = x.shape
    H = whh.shape[1]
    h = jnp.zeros((B, H), jnp.float32)
    c = jnp.zeros((B, H), jnp.float32)
    for t in range(T):
        gates = x[:, t, :] @ wih.T + b_ih + h @ whh.T + b_hh
        i_g = jax.nn.sigmoid(gates[:, 0 * H:1 * H])
        f_g = jax.nn.sigmoid(gates[:, 1 * H:2 * H])
        g_g = jnp.tanh(gates[:, 2 * H:3 * H])
        o_g = jax.nn.sigmoid(gates[:, 3 * H:4 * H])
        c = f_g * c + i_g * g_g
        h = o_g * jnp.tanh(c)
    return h @ wlin.T + blin


if __name__ == "__main__":
    B, T, I = 2, 8, 1
    H, O = HIDDEN_SIZE, 1

    key = jax.random.PRNGKey(0)
    ks = jax.random.split(key, 7)
    bound = 1.0 / jnp.sqrt(H)  # PyTorch default uniform init range
    x = jax.random.normal(ks[0], (B, T, I), jnp.float32)
    wih = jax.random.uniform(ks[1], (4 * H, I), jnp.float32, -bound, bound)
    whh = jax.random.uniform(ks[2], (4 * H, H), jnp.float32, -bound, bound)
    b_ih = jax.random.uniform(ks[3], (4 * H,), jnp.float32, -bound, bound)
    b_hh = jax.random.uniform(ks[4], (4 * H,), jnp.float32, -bound, bound)
    wlin = jax.random.uniform(ks[5], (O, H), jnp.float32, -bound, bound)
    blin = jax.random.uniform(ks[6], (O,), jnp.float32, -bound, bound)

    out = lstm_model_forward(x, wih, whh, b_ih, b_hh, wlin, blin)
    out = jax.block_until_ready(out)

    ref = ref_forward(x, wih, whh, b_ih, b_hh, wlin, blin)
    assert out.shape == (B, O)
    # Tolerance relaxed vs. 1e-5: the hidden->gates matmul runs with bf16
    # operands (f32 accumulate) per the perf review.
    assert jnp.allclose(out, ref, atol=2e-2, rtol=1e-2), (out, ref)
    print("KERNEL_OK")
</pallas_src>

<mosaic_0001>
module attributes {stable_mosaic.version = 11 : i64} {
  func.func @lstm_fused_kernel(%arg0: i32, %arg1: memref<8x8xf32, #tpu.memory_space<vmem>>, %arg2: memref<1x256xf32, #tpu.memory_space<vmem>>, %arg3: memref<64x256xbf16, #tpu.memory_space<vmem>>, %arg4: memref<1x256xf32, #tpu.memory_space<vmem>>, %arg5: memref<8x64xf32, #tpu.memory_space<vmem>>) attributes {dimension_semantics = [#tpu.dimension_semantics<parallel>], iteration_bounds = array<i64: 1>, scalar_prefetch = 0 : i64, scratch_operands = 0 : i64, tpu.core_type = #tpu.core_type<tc>, window_params = [{transform_indices = @transform_0, window_bounds = array<i64: 8, 8>}, {pipeline_mode = #tpu.pipeline_mode<synchronous>, transform_indices = @transform_1, window_bounds = array<i64: 1, 256>}, {pipeline_mode = #tpu.pipeline_mode<synchronous>, transform_indices = @transform_2, window_bounds = array<i64: 64, 256>}, {pipeline_mode = #tpu.pipeline_mode<synchronous>, transform_indices = @transform_3, window_bounds = array<i64: 1, 256>}, {transform_indices = @transform_4, window_bounds = array<i64: 8, 64>}]} {
    %c0 = arith.constant 0 : index
    %c0_0 = arith.constant 0 : index
    %0 = vector.load %arg4[%c0, %c0_0] : memref<1x256xf32, #tpu.memory_space<vmem>>, vector<1x256xf32>
    %cst = arith.constant 0.000000e+00 : f32
    %1 = vector.broadcast %cst : f32 to vector<8x64xf32>
    %cst_1 = arith.constant 0.000000e+00 : f32
    %2 = vector.broadcast %cst_1 : f32 to vector<8x64xf32>
    %c0_2 = arith.constant 0 : index
    %c0_3 = arith.constant 0 : index
    %3 = vector.load %arg1[%c0_2, %c0_3] : memref<8x8xf32, #tpu.memory_space<vmem>>, vector<8x1xf32>
    %c0_4 = arith.constant 0 : index
    %c0_5 = arith.constant 0 : index
    %4 = vector.load %arg2[%c0_4, %c0_5] : memref<1x256xf32, #tpu.memory_space<vmem>>, vector<1x256xf32>
    %5 = vector.broadcast %3 : vector<8x1xf32> to vector<8x256xf32>
    %6 = vector.broadcast %4 : vector<1x256xf32> to vector<8x256xf32>
    %7 = arith.mulf %5, %6 : vector<8x256xf32>
    %8 = arith.truncf %1 : vector<8x64xf32> to vector<8x64xbf16>
    %c0_6 = arith.constant 0 : index
    %c0_7 = arith.constant 0 : index
    %9 = vector.load %arg3[%c0_6, %c0_7] : memref<64x256xbf16, #tpu.memory_space<vmem>>, vector<64x256xbf16>
    %cst_8 = arith.constant dense<0.000000e+00> : vector<8x256xf32>
    %10 = tpu.matmul %8, %9, %cst_8 {dimension_numbers = #tpu.dot_dimension_numbers<[1], [0], [0], [1], [0, 0, 1, 1], [], []>} : vector<8x64xbf16>, vector<64x256xbf16>, vector<8x256xf32> -> vector<8x256xf32>
    %11 = arith.addf %7, %10 : vector<8x256xf32>
    %12 = vector.broadcast %0 : vector<1x256xf32> to vector<8x256xf32>
    %13 = arith.addf %11, %12 : vector<8x256xf32>
    %14 = arith.negf %13 : vector<8x256xf32>
    %15 = math.exp %14 : vector<8x256xf32>
    %cst_9 = arith.constant 1.000000e+00 : f32
    %16 = vector.broadcast %cst_9 : f32 to vector<8x256xf32>
    %17 = arith.addf %16, %15 : vector<8x256xf32>
    %18 = arith.divf %16, %17 : vector<8x256xf32>
    %19 = vector.extract_strided_slice %18 {offsets = [0, 0], sizes = [8, 64], strides = [1, 1]} : vector<8x256xf32> to vector<8x64xf32>
    %20 = vector.extract_strided_slice %18 {offsets = [0, 64], sizes = [8, 64], strides = [1, 1]} : vector<8x256xf32> to vector<8x64xf32>
    %21 = vector.extract_strided_slice %18 {offsets = [0, 192], sizes = [8, 64], strides = [1, 1]} : vector<8x256xf32> to vector<8x64xf32>
    %22 = vector.extract_strided_slice %13 {offsets = [0, 128], sizes = [8, 64], strides = [1, 1]} : vector<8x256xf32> to vector<8x64xf32>
    %23 = math.tanh %22 : vector<8x64xf32>
    %24 = arith.mulf %20, %2 : vector<8x64xf32>
    %25 = arith.mulf %19, %23 : vector<8x64xf32>
    %26 = arith.addf %24, %25 : vector<8x64xf32>
    %27 = math.tanh %26 : vector<8x64xf32>
    %28 = arith.mulf %21, %27 : vector<8x64xf32>
    %c0_10 = arith.constant 0 : index
    %c1 = arith.constant 1 : index
    %29 = vector.load %arg1[%c0_10, %c1] : memref<8x8xf32, #tpu.memory_space<vmem>>, vector<8x1xf32>
    %c0_11 = arith.constant 0 : index
    %c0_12 = arith.constant 0 : index
    %30 = vector.load %arg2[%c0_11, %c0_12] : memref<1x256xf32, #tpu.memory_space<vmem>>, vector<1x256xf32>
    %31 = vector.broadcast %29 : vector<8x1xf32> to vector<8x256xf32>
    %32 = vector.broadcast %30 : vector<1x256xf32> to vector<8x256xf32>
    %33 = arith.mulf %31, %32 : vector<8x256xf32>
    %34 = arith.truncf %28 : vector<8x64xf32> to vector<8x64xbf16>
    %c0_13 = arith.constant 0 : index
    %c0_14 = arith.constant 0 : index
    %35 = vector.load %arg3[%c0_13, %c0_14] : memref<64x256xbf16, #tpu.memory_space<vmem>>, vector<64x256xbf16>
    %cst_15 = arith.constant dense<0.000000e+00> : vector<8x256xf32>
    %36 = tpu.matmul %34, %35, %cst_15 {dimension_numbers = #tpu.dot_dimension_numbers<[1], [0], [0], [1], [0, 0, 1, 1], [], []>} : vector<8x64xbf16>, vector<64x256xbf16>, vector<8x256xf32> -> vector<8x256xf32>
    %37 = arith.addf %33, %36 : vector<8x256xf32>
    %38 = vector.broadcast %0 : vector<1x256xf32> to vector<8x256xf32>
    %39 = arith.addf %37, %38 : vector<8x256xf32>
    %40 = arith.negf %39 : vector<8x256xf32>
    %41 = math.exp %40 : vector<8x256xf32>
    %cst_16 = arith.constant 1.000000e+00 : f32
    %42 = vector.broadcast %cst_16 : f32 to vector<8x256xf32>
    %43 = arith.addf %42, %41 : vector<8x256xf32>
    %44 = arith.divf %42, %43 : vector<8x256xf32>
    %45 = vector.extract_strided_slice %44 {offsets = [0, 0], sizes = [8, 64], strides = [1, 1]} : vector<8x256xf32> to vector<8x64xf32>
    %46 = vector.extract_strided_slice %44 {offsets = [0, 64], sizes = [8, 64], strides = [1, 1]} : vector<8x256xf32> to vector<8x64xf32>
    %47 = vector.extract_strided_slice %44 {offsets = [0, 192], sizes = [8, 64], strides = [1, 1]} : vector<8x256xf32> to vector<8x64xf32>
    %48 = vector.extract_strided_slice %39 {offsets = [0, 128], sizes = [8, 64], strides = [1, 1]} : vector<8x256xf32> to vector<8x64xf32>
    %49 = math.tanh %48 : vector<8x64xf32>
    %50 = arith.mulf %46, %26 : vector<8x64xf32>
    %51 = arith.mulf %45, %49 : vector<8x64xf32>
    %52 = arith.addf %50, %51 : vector<8x64xf32>
    %53 = math.tanh %52 : vector<8x64xf32>
    %54 = arith.mulf %47, %53 : vector<8x64xf32>
    %c0_17 = arith.constant 0 : index
    %c2 = arith.constant 2 : index
    %55 = vector.load %arg1[%c0_17, %c2] : memref<8x8xf32, #tpu.memory_space<vmem>>, vector<8x1xf32>
    %c0_18 = arith.constant 0 : index
    %c0_19 = arith.constant 0 : index
    %56 = vector.load %arg2[%c0_18, %c0_19] : memref<1x256xf32, #tpu.memory_space<vmem>>, vector<1x256xf32>
    %57 = vector.broadcast %55 : vector<8x1xf32> to vector<8x256xf32>
    %58 = vector.broadcast %56 : vector<1x256xf32> to vector<8x256xf32>
    %59 = arith.mulf %57, %58 : vector<8x256xf32>
    %60 = arith.truncf %54 : vector<8x64xf32> to vector<8x64xbf16>
    %c0_20 = arith.constant 0 : index
    %c0_21 = arith.constant 0 : index
    %61 = vector.load %arg3[%c0_20, %c0_21] : memref<64x256xbf16, #tpu.memory_space<vmem>>, vector<64x256xbf16>
    %cst_22 = arith.constant dense<0.000000e+00> : vector<8x256xf32>
    %62 = tpu.matmul %60, %61, %cst_22 {dimension_numbers = #tpu.dot_dimension_numbers<[1], [0], [0], [1], [0, 0, 1, 1], [], []>} : vector<8x64xbf16>, vector<64x256xbf16>, vector<8x256xf32> -> vector<8x256xf32>
    %63 = arith.addf %59, %62 : vector<8x256xf32>
    %64 = vector.broadcast %0 : vector<1x256xf32> to vector<8x256xf32>
    %65 = arith.addf %63, %64 : vector<8x256xf32>
    %66 = arith.negf %65 : vector<8x256xf32>
    %67 = math.exp %66 : vector<8x256xf32>
    %cst_23 = arith.constant 1.000000e+00 : f32
    %68 = vector.broadcast %cst_23 : f32 to vector<8x256xf32>
    %69 = arith.addf %68, %67 : vector<8x256xf32>
    %70 = arith.divf %68, %69 : vector<8x256xf32>
    %71 = vector.extract_strided_slice %70 {offsets = [0, 0], sizes = [8, 64], strides = [1, 1]} : vector<8x256xf32> to vector<8x64xf32>
    %72 = vector.extract_strided_slice %70 {offsets = [0, 64], sizes = [8, 64], strides = [1, 1]} : vector<8x256xf32> to vector<8x64xf32>
    %73 = vector.extract_strided_slice %70 {offsets = [0, 192], sizes = [8, 64], strides = [1, 1]} : vector<8x256xf32> to vector<8x64xf32>
    %74 = vector.extract_strided_slice %65 {offsets = [0, 128], sizes = [8, 64], strides = [1, 1]} : vector<8x256xf32> to vector<8x64xf32>
    %75 = math.tanh %74 : vector<8x64xf32>
    %76 = arith.mulf %72, %52 : vector<8x64xf32>
    %77 = arith.mulf %71, %75 : vector<8x64xf32>
    %78 = arith.addf %76, %77 : vector<8x64xf32>
    %79 = math.tanh %78 : vector<8x64xf32>
    %80 = arith.mulf %73, %79 : vector<8x64xf32>
    %c0_24 = arith.constant 0 : index
    %c3 = arith.constant 3 : index
    %81 = vector.load %arg1[%c0_24, %c3] : memref<8x8xf32, #tpu.memory_space<vmem>>, vector<8x1xf32>
    %c0_25 = arith.constant 0 : index
    %c0_26 = arith.constant 0 : index
    %82 = vector.load %arg2[%c0_25, %c0_26] : memref<1x256xf32, #tpu.memory_space<vmem>>, vector<1x256xf32>
    %83 = vector.broadcast %81 : vector<8x1xf32> to vector<8x256xf32>
    %84 = vector.broadcast %82 : vector<1x256xf32> to vector<8x256xf32>
    %85 = arith.mulf %83, %84 : vector<8x256xf32>
    %86 = arith.truncf %80 : vector<8x64xf32> to vector<8x64xbf16>
    %c0_27 = arith.constant 0 : index
    %c0_28 = arith.constant 0 : index
    %87 = vector.load %arg3[%c0_27, %c0_28] : memref<64x256xbf16, #tpu.memory_space<vmem>>, vector<64x256xbf16>
    %cst_29 = arith.constant dense<0.000000e+00> : vector<8x256xf32>
    %88 = tpu.matmul %86, %87, %cst_29 {dimension_numbers = #tpu.dot_dimension_numbers<[1], [0], [0], [1], [0, 0, 1, 1], [], []>} : vector<8x64xbf16>, vector<64x256xbf16>, vector<8x256xf32> -> vector<8x256xf32>
    %89 = arith.addf %85, %88 : vector<8x256xf32>
    %90 = vector.broadcast %0 : vector<1x256xf32> to vector<8x256xf32>
    %91 = arith.addf %89, %90 : vector<8x256xf32>
    %92 = arith.negf %91 : vector<8x256xf32>
    %93 = math.exp %92 : vector<8x256xf32>
    %cst_30 = arith.constant 1.000000e+00 : f32
    %94 = vector.broadcast %cst_30 : f32 to vector<8x256xf32>
    %95 = arith.addf %94, %93 : vector<8x256xf32>
    %96 = arith.divf %94, %95 : vector<8x256xf32>
    %97 = vector.extract_strided_slice %96 {offsets = [0, 0], sizes = [8, 64], strides = [1, 1]} : vector<8x256xf32> to vector<8x64xf32>
    %98 = vector.extract_strided_slice %96 {offsets = [0, 64], sizes = [8, 64], strides = [1, 1]} : vector<8x256xf32> to vector<8x64xf32>
    %99 = vector.extract_strided_slice %96 {offsets = [0, 192], sizes = [8, 64], strides = [1, 1]} : vector<8x256xf32> to vector<8x64xf32>
    %100 = vector.extract_strided_slice %91 {offsets = [0, 128], sizes = [8, 64], strides = [1, 1]} : vector<8x256xf32> to vector<8x64xf32>
    %101 = math.tanh %100 : vector<8x64xf32>
    %102 = arith.mulf %98, %78 : vector<8x64xf32>
    %103 = arith.mulf %97, %101 : vector<8x64xf32>
    %104 = arith.addf %102, %103 : vector<8x64xf32>
    %105 = math.tanh %104 : vector<8x64xf32>
    %106 = arith.mulf %99, %105 : vector<8x64xf32>
    %c0_31 = arith.constant 0 : index
    %c4 = arith.constant 4 : index
    %107 = vector.load %arg1[%c0_31, %c4] : memref<8x8xf32, #tpu.memory_space<vmem>>, vector<8x1xf32>
    %c0_32 = arith.constant 0 : index
    %c0_33 = arith.constant 0 : index
    %108 = vector.load %arg2[%c0_32, %c0_33] : memref<1x256xf32, #tpu.memory_space<vmem>>, vector<1x256xf32>
    %109 = vector.broadcast %107 : vector<8x1xf32> to vector<8x256xf32>
    %110 = vector.broadcast %108 : vector<1x256xf32> to vector<8x256xf32>
    %111 = arith.mulf %109, %110 : vector<8x256xf32>
    %112 = arith.truncf %106 : vector<8x64xf32> to vector<8x64xbf16>
    %c0_34 = arith.constant 0 : index
    %c0_35 = arith.constant 0 : index
    %113 = vector.load %arg3[%c0_34, %c0_35] : memref<64x256xbf16, #tpu.memory_space<vmem>>, vector<64x256xbf16>
    %cst_36 = arith.constant dense<0.000000e+00> : vector<8x256xf32>
    %114 = tpu.matmul %112, %113, %cst_36 {dimension_numbers = #tpu.dot_dimension_numbers<[1], [0], [0], [1], [0, 0, 1, 1], [], []>} : vector<8x64xbf16>, vector<64x256xbf16>, vector<8x256xf32> -> vector<8x256xf32>
    %115 = arith.addf %111, %114 : vector<8x256xf32>
    %116 = vector.broadcast %0 : vector<1x256xf32> to vector<8x256xf32>
    %117 = arith.addf %115, %116 : vector<8x256xf32>
    %118 = arith.negf %117 : vector<8x256xf32>
    %119 = math.exp %118 : vector<8x256xf32>
    %cst_37 = arith.constant 1.000000e+00 : f32
    %120 = vector.broadcast %cst_37 : f32 to vector<8x256xf32>
    %121 = arith.addf %120, %119 : vector<8x256xf32>
    %122 = arith.divf %120, %121 : vector<8x256xf32>
    %123 = vector.extract_strided_slice %122 {offsets = [0, 0], sizes = [8, 64], strides = [1, 1]} : vector<8x256xf32> to vector<8x64xf32>
    %124 = vector.extract_strided_slice %122 {offsets = [0, 64], sizes = [8, 64], strides = [1, 1]} : vector<8x256xf32> to vector<8x64xf32>
    %125 = vector.extract_strided_slice %122 {offsets = [0, 192], sizes = [8, 64], strides = [1, 1]} : vector<8x256xf32> to vector<8x64xf32>
    %126 = vector.extract_strided_slice %117 {offsets = [0, 128], sizes = [8, 64], strides = [1, 1]} : vector<8x256xf32> to vector<8x64xf32>
    %127 = math.tanh %126 : vector<8x64xf32>
    %128 = arith.mulf %124, %104 : vector<8x64xf32>
    %129 = arith.mulf %123, %127 : vector<8x64xf32>
    %130 = arith.addf %128, %129 : vector<8x64xf32>
    %131 = math.tanh %130 : vector<8x64xf32>
    %132 = arith.mulf %125, %131 : vector<8x64xf32>
    %c0_38 = arith.constant 0 : index
    %c5 = arith.constant 5 : index
    %133 = vector.load %arg1[%c0_38, %c5] : memref<8x8xf32, #tpu.memory_space<vmem>>, vector<8x1xf32>
    %c0_39 = arith.constant 0 : index
    %c0_40 = arith.constant 0 : index
    %134 = vector.load %arg2[%c0_39, %c0_40] : memref<1x256xf32, #tpu.memory_space<vmem>>, vector<1x256xf32>
    %135 = vector.broadcast %133 : vector<8x1xf32> to vector<8x256xf32>
    %136 = vector.broadcast %134 : vector<1x256xf32> to vector<8x256xf32>
    %137 = arith.mulf %135, %136 : vector<8x256xf32>
    %138 = arith.truncf %132 : vector<8x64xf32> to vector<8x64xbf16>
    %c0_41 = arith.constant 0 : index
    %c0_42 = arith.constant 0 : index
    %139 = vector.load %arg3[%c0_41, %c0_42] : memref<64x256xbf16, #tpu.memory_space<vmem>>, vector<64x256xbf16>
    %cst_43 = arith.constant dense<0.000000e+00> : vector<8x256xf32>
    %140 = tpu.matmul %138, %139, %cst_43 {dimension_numbers = #tpu.dot_dimension_numbers<[1], [0], [0], [1], [0, 0, 1, 1], [], []>} : vector<8x64xbf16>, vector<64x256xbf16>, vector<8x256xf32> -> vector<8x256xf32>
    %141 = arith.addf %137, %140 : vector<8x256xf32>
    %142 = vector.broadcast %0 : vector<1x256xf32> to vector<8x256xf32>
    %143 = arith.addf %141, %142 : vector<8x256xf32>
    %144 = arith.negf %143 : vector<8x256xf32>
    %145 = math.exp %144 : vector<8x256xf32>
    %cst_44 = arith.constant 1.000000e+00 : f32
    %146 = vector.broadcast %cst_44 : f32 to vector<8x256xf32>
    %147 = arith.addf %146, %145 : vector<8x256xf32>
    %148 = arith.divf %146, %147 : vector<8x256xf32>
    %149 = vector.extract_strided_slice %148 {offsets = [0, 0], sizes = [8, 64], strides = [1, 1]} : vector<8x256xf32> to vector<8x64xf32>
    %150 = vector.extract_strided_slice %148 {offsets = [0, 64], sizes = [8, 64], strides = [1, 1]} : vector<8x256xf32> to vector<8x64xf32>
    %151 = vector.extract_strided_slice %148 {offsets = [0, 192], sizes = [8, 64], strides = [1, 1]} : vector<8x256xf32> to vector<8x64xf32>
    %152 = vector.extract_strided_slice %143 {offsets = [0, 128], sizes = [8, 64], strides = [1, 1]} : vector<8x256xf32> to vector<8x64xf32>
    %153 = math.tanh %152 : vector<8x64xf32>
    %154 = arith.mulf %150, %130 : vector<8x64xf32>
    %155 = arith.mulf %149, %153 : vector<8x64xf32>
    %156 = arith.addf %154, %155 : vector<8x64xf32>
    %157 = math.tanh %156 : vector<8x64xf32>
    %158 = arith.mulf %151, %157 : vector<8x64xf32>
    %c0_45 = arith.constant 0 : index
    %c6 = arith.constant 6 : index
    %159 = vector.load %arg1[%c0_45, %c6] : memref<8x8xf32, #tpu.memory_space<vmem>>, vector<8x1xf32>
    %c0_46 = arith.constant 0 : index
    %c0_47 = arith.constant 0 : index
    %160 = vector.load %arg2[%c0_46, %c0_47] : memref<1x256xf32, #tpu.memory_space<vmem>>, vector<1x256xf32>
    %161 = vector.broadcast %159 : vector<8x1xf32> to vector<8x256xf32>
    %162 = vector.broadcast %160 : vector<1x256xf32> to vector<8x256xf32>
    %163 = arith.mulf %161, %162 : vector<8x256xf32>
    %164 = arith.truncf %158 : vector<8x64xf32> to vector<8x64xbf16>
    %c0_48 = arith.constant 0 : index
    %c0_49 = arith.constant 0 : index
    %165 = vector.load %arg3[%c0_48, %c0_49] : memref<64x256xbf16, #tpu.memory_space<vmem>>, vector<64x256xbf16>
    %cst_50 = arith.constant dense<0.000000e+00> : vector<8x256xf32>
    %166 = tpu.matmul %164, %165, %cst_50 {dimension_numbers = #tpu.dot_dimension_numbers<[1], [0], [0], [1], [0, 0, 1, 1], [], []>} : vector<8x64xbf16>, vector<64x256xbf16>, vector<8x256xf32> -> vector<8x256xf32>
    %167 = arith.addf %163, %166 : vector<8x256xf32>
    %168 = vector.broadcast %0 : vector<1x256xf32> to vector<8x256xf32>
    %169 = arith.addf %167, %168 : vector<8x256xf32>
    %170 = arith.negf %169 : vector<8x256xf32>
    %171 = math.exp %170 : vector<8x256xf32>
    %cst_51 = arith.constant 1.000000e+00 : f32
    %172 = vector.broadcast %cst_51 : f32 to vector<8x256xf32>
    %173 = arith.addf %172, %171 : vector<8x256xf32>
    %174 = arith.divf %172, %173 : vector<8x256xf32>
    %175 = vector.extract_strided_slice %174 {offsets = [0, 0], sizes = [8, 64], strides = [1, 1]} : vector<8x256xf32> to vector<8x64xf32>
    %176 = vector.extract_strided_slice %174 {offsets = [0, 64], sizes = [8, 64], strides = [1, 1]} : vector<8x256xf32> to vector<8x64xf32>
    %177 = vector.extract_strided_slice %174 {offsets = [0, 192], sizes = [8, 64], strides = [1, 1]} : vector<8x256xf32> to vector<8x64xf32>
    %178 = vector.extract_strided_slice %169 {offsets = [0, 128], sizes = [8, 64], strides = [1, 1]} : vector<8x256xf32> to vector<8x64xf32>
    %179 = math.tanh %178 : vector<8x64xf32>
    %180 = arith.mulf %176, %156 : vector<8x64xf32>
    %181 = arith.mulf %175, %179 : vector<8x64xf32>
    %182 = arith.addf %180, %181 : vector<8x64xf32>
    %183 = math.tanh %182 : vector<8x64xf32>
    %184 = arith.mulf %177, %183 : vector<8x64xf32>
    %c0_52 = arith.constant 0 : index
    %c7 = arith.constant 7 : index
    %185 = vector.load %arg1[%c0_52, %c7] : memref<8x8xf32, #tpu.memory_space<vmem>>, vector<8x1xf32>
    %c0_53 = arith.constant 0 : index
    %c0_54 = arith.constant 0 : index
    %186 = vector.load %arg2[%c0_53, %c0_54] : memref<1x256xf32, #tpu.memory_space<vmem>>, vector<1x256xf32>
    %187 = vector.broadcast %185 : vector<8x1xf32> to vector<8x256xf32>
    %188 = vector.broadcast %186 : vector<1x256xf32> to vector<8x256xf32>
    %189 = arith.mulf %187, %188 : vector<8x256xf32>
    %190 = arith.truncf %184 : vector<8x64xf32> to vector<8x64xbf16>
    %c0_55 = arith.constant 0 : index
    %c0_56 = arith.constant 0 : index
    %191 = vector.load %arg3[%c0_55, %c0_56] : memref<64x256xbf16, #tpu.memory_space<vmem>>, vector<64x256xbf16>
    %cst_57 = arith.constant dense<0.000000e+00> : vector<8x256xf32>
    %192 = tpu.matmul %190, %191, %cst_57 {dimension_numbers = #tpu.dot_dimension_numbers<[1], [0], [0], [1], [0, 0, 1, 1], [], []>} : vector<8x64xbf16>, vector<64x256xbf16>, vector<8x256xf32> -> vector<8x256xf32>
    %193 = arith.addf %189, %192 : vector<8x256xf32>
    %194 = vector.broadcast %0 : vector<1x256xf32> to vector<8x256xf32>
    %195 = arith.addf %193, %194 : vector<8x256xf32>
    %196 = arith.negf %195 : vector<8x256xf32>
    %197 = math.exp %196 : vector<8x256xf32>
    %cst_58 = arith.constant 1.000000e+00 : f32
    %198 = vector.broadcast %cst_58 : f32 to vector<8x256xf32>
    %199 = arith.addf %198, %197 : vector<8x256xf32>
    %200 = arith.divf %198, %199 : vector<8x256xf32>
    %201 = vector.extract_strided_slice %200 {offsets = [0, 0], sizes = [8, 64], strides = [1, 1]} : vector<8x256xf32> to vector<8x64xf32>
    %202 = vector.extract_strided_slice %200 {offsets = [0, 64], sizes = [8, 64], strides = [1, 1]} : vector<8x256xf32> to vector<8x64xf32>
    %203 = vector.extract_strided_slice %200 {offsets = [0, 192], sizes = [8, 64], strides = [1, 1]} : vector<8x256xf32> to vector<8x64xf32>
    %204 = vector.extract_strided_slice %195 {offsets = [0, 128], sizes = [8, 64], strides = [1, 1]} : vector<8x256xf32> to vector<8x64xf32>
    %205 = math.tanh %204 : vector<8x64xf32>
    %206 = arith.mulf %202, %182 : vector<8x64xf32>
    %207 = arith.mulf %201, %205 : vector<8x64xf32>
    %208 = arith.addf %206, %207 : vector<8x64xf32>
    %209 = math.tanh %208 : vector<8x64xf32>
    %210 = arith.mulf %203, %209 : vector<8x64xf32>
    %c0_59 = arith.constant 0 : index
    %c0_60 = arith.constant 0 : index
    %211 = vector.load %arg5[%c0_59, %c0_60] : memref<8x64xf32, #tpu.memory_space<vmem>>, vector<8x64xf32>
    tpu.vector_store %arg5[%c0_59, %c0_60], %210 {strides = array<i32>} : memref<8x64xf32, #tpu.memory_space<vmem>>, vector<8x64xf32>,
    return
  }
  func.func @transform_0(%arg0: i32) -> (i32, i32) {
    %c0_i32 = arith.constant 0 : i32
    %c0_i32_0 = arith.constant 0 : i32
    return %arg0, %c0_i32 : i32, i32
  }
  func.func @transform_1(%arg0: i32) -> (i32, i32) {
    %c0_i32 = arith.constant 0 : i32
    %c0_i32_0 = arith.constant 0 : i32
    %c0_i32_1 = arith.constant 0 : i32
    return %c0_i32, %c0_i32_0 : i32, i32
  }
  func.func @transform_2(%arg0: i32) -> (i32, i32) {
    %c0_i32 = arith.constant 0 : i32
    %c0_i32_0 = arith.constant 0 : i32
    %c0_i32_1 = arith.constant 0 : i32
    return %c0_i32, %c0_i32_0 : i32, i32
  }
  func.func @transform_3(%arg0: i32) -> (i32, i32) {
    %c0_i32 = arith.constant 0 : i32
    %c0_i32_0 = arith.constant 0 : i32
    %c0_i32_1 = arith.constant 0 : i32
    return %c0_i32, %c0_i32_0 : i32, i32
  }
  func.func @transform_4(%arg0: i32) -> (i32, i32) {
    %c0_i32 = arith.constant 0 : i32
    %c0_i32_0 = arith.constant 0 : i32
    return %arg0, %c0_i32 : i32, i32
  }
}

</mosaic_0001>

<llo_original>
// kernel: tpu_custom_call.1
$region0: #{tpu_custom_call.1}
  #allocation0 [shape = 'u32[]', space=smem, size = 0x4, offset = 0x4, fixed_abs, tag = 'smem constant byte address 0x4 - core index']
  #allocation1 [shape = 'u32[72,128]{1,0:T(1,128)}', space=vmem, size = 0x9000, scoped, tag = 'internal scratch']
  %s0 = inlined_call_operand.hbm [shape: f32[8,8], index: 0, kind: input, shape index: {}]
  %s1 = inlined_call_operand.hbm [shape: f32[1,256], index: 1, kind: input, shape index: {}]
  %s2 = inlined_call_operand.hbm [shape: bf16[64,256], index: 2, kind: input, shape index: {}]
  %s3 = inlined_call_operand.vmem [shape: f32[1,256], index: 3, kind: input, shape index: {}]
  %s4 = inlined_call_operand.hbm [shape: f32[8,64], index: 4, kind: output, shape index: {}]
  %s5 = sld [smem:[#allocation0]]
  $region38: #{tpu_custom_call.1} parent=0
    _
  %s7 = ssub.s32 1, %s5
  %s8 = scalar_select 0, %s7, %s5
  $region1: #{tpu_custom_call.1} parent=0
    #allocation2 [shape = 'u8[4096]{0}', space=vmem, size = 0x1000, scoped, tag = 'input window, operand 0, single buffered']
    #allocation3 [shape = 's32[1]{0}', space=sflag, size = 0x4, scoped, tag = 'scoped memory for tpu_custom_call.1']
    #allocation4 [shape = 's32[1]{0}', space=sflag, size = 0x4, scoped, tag = 'scoped memory for tpu_custom_call.1']
    #allocation5 [shape = 'u8[1024]{0}', space=vmem, size = 0x400, scoped, tag = 'input window, operand 1, single buffered']
    #allocation6 [shape = 's32[1]{0}', space=sflag, size = 0x4, scoped, tag = 'scoped memory for tpu_custom_call.1']
    #allocation7 [shape = 'u8[32768]{0}', space=vmem, size = 0x8000, scoped, tag = 'input window, operand 2, single buffered']
    #allocation8 [shape = 'u8[4096]{0}', space=vmem, size = 0x1000, scoped, tag = 'output window, operand 0, single buffered']
    %9 = vsyncpa [#allocation3], 0
    %10 = vsyncpa [#allocation6], 0
    %11 = vsyncpa [#allocation4], 0
    // Predicated region
    $region2: #{tpu_custom_call.1} parent=1 // pred_check
      _
    $region3: #{tpu_custom_call.1} parent=1 // pred_check_branch
      %13 = sbr.rel (0) target = $region5
    $region4: #{tpu_custom_call.1} parent=1 // pred_region
      %15 = vsyncadd [#allocation3], 0
      %s17 = sshll.u32 %s0, 4
      %s18 = int_to_ptr.hbm [resolvable:$true] %s17
      %s19 = sshll.u32 [#allocation2], 4
      %s20 = int_to_ptr.vmem [resolvable:$true] %s19
      %22 = dma.hbm_to_vmem [thread:$0]  %s18, 128, %s20, [#allocation3]
    $region5: #{tpu_custom_call.1} parent=1 // pred_fallthru
      _
    // Predicated region
    $region6: #{tpu_custom_call.1} parent=1 // pred_check
      _
    $region7: #{tpu_custom_call.1} parent=1 // pred_check_branch
      %24 = sbr.rel (0) target = $region9
    $region8: #{tpu_custom_call.1} parent=1 // pred_region
      %26 = vsyncadd [#allocation6], 0
      %s28 = sshll.u32 %s1, 4
      %s29 = int_to_ptr.hbm [resolvable:$true] %s28
      %s30 = sshll.u32 [#allocation5], 4
      %s31 = int_to_ptr.vmem [resolvable:$true] %s30
      %33 = dma.hbm_to_vmem [thread:$0]  %s29, 32, %s31, [#allocation6]
    $region9: #{tpu_custom_call.1} parent=1 // pred_fallthru
      _
    // Predicated region
    $region10: #{tpu_custom_call.1} parent=1 // pred_check
      _
    $region11: #{tpu_custom_call.1} parent=1 // pred_check_branch
      %35 = sbr.rel (0) target = $region13
    $region12: #{tpu_custom_call.1} parent=1 // pred_region
      %37 = vsyncadd [#allocation6], 0
      %s38 = sshll.u32 %s2, 4
      %s39 = int_to_ptr.hbm [resolvable:$true] %s38
      %s40 = sshll.u32 [#allocation7], 4
      %s41 = int_to_ptr.vmem [resolvable:$true] %s40
      %46 = dma.hbm_to_vmem [thread:$0]  %s39, 1024, %s41, [#allocation6], 128, 128, 8
    $region13: #{tpu_custom_call.1} parent=1 // pred_fallthru
      _
    // Predicated region
    $region14: #{tpu_custom_call.1} parent=1 // pred_check
      _
    $region15: #{tpu_custom_call.1} parent=1 // pred_check_branch
      %48 = sbr.rel (0) target = $region17
    $region16: #{tpu_custom_call.1} parent=1 // pred_region
      _
    $region17: #{tpu_custom_call.1} parent=1 // pred_fallthru
      _
    // Predicated region
    $region18: #{tpu_custom_call.1} parent=1 // pred_check
      _
    $region19: #{tpu_custom_call.1} parent=1 // pred_check_branch
      %50 = sbr.rel (0) target = $region21
    $region20: #{tpu_custom_call.1} parent=1 // pred_region
      %52 = dma.done [#allocation3], 128
    $region21: #{tpu_custom_call.1} parent=1 // pred_fallthru
      _
    // Predicated region
    $region22: #{tpu_custom_call.1} parent=1 // pred_check
      _
    $region23: #{tpu_custom_call.1} parent=1 // pred_check_branch
      %54 = sbr.rel (0) target = $region25
    $region24: #{tpu_custom_call.1} parent=1 // pred_region
      %56 = dma.done [#allocation6], 32
    $region25: #{tpu_custom_call.1} parent=1 // pred_fallthru
      _
    // Predicated region
    $region26: #{tpu_custom_call.1} parent=1 // pred_check
      _
    $region27: #{tpu_custom_call.1} parent=1 // pred_check_branch
      %58 = sbr.rel (0) target = $region29
    $region28: #{tpu_custom_call.1} parent=1 // pred_region
      %60 = dma.done [#allocation6], 1024
    $region29: #{tpu_custom_call.1} parent=1 // pred_fallthru
      _
    %v62 = vld [vmem:[%s3] sm:$0x3]
    %v63 = vld [vmem:[#allocation2] sm:$0xff]
    %v64 = vld [vmem:[#allocation5] sm:$0x3]
    %66 = vset.pattern.permute.xlu0 0
    %67 = vperm.xlu0 %66, %v63
    %v68 = vpop.permute.xlu0 %67
    %v71 = vperm.slane %v64, 0
    %v72 = vperm.slane %v64, 1
    %v75 = vmul.f32 %v68, %v71
    %v76 = vmul.f32 %v68, %v72
    %v77 = vld [vmem:[#allocation7] sm:$0xff]
    %v78 = vld [vmem:[#allocation7 + $0x8] sm:$0xff]
    %v79 = vld [vmem:[#allocation7 + $0x10] sm:$0xff]
    %v80 = vld [vmem:[#allocation7 + $0x18] sm:$0xff]
    %v81 = vld [vmem:[#allocation7 + $0x20] sm:$0xff]
    %v82 = vld [vmem:[#allocation7 + $0x28] sm:$0xff]
    %v83 = vld [vmem:[#allocation7 + $0x30] sm:$0xff]
    %v84 = vld [vmem:[#allocation7 + $0x38] sm:$0xff]
    %v93 = vunpack.c.l.b16 %v77
    %v94 = vunpack.c.h.b16 %v77
    %v95 = vunpack.c.l.b16 %v78
    %v96 = vunpack.c.h.b16 %v78
    %v97 = vunpack.c.l.b16 %v79
    %v98 = vunpack.c.h.b16 %v79
    %v99 = vunpack.c.l.b16 %v80
    %v100 = vunpack.c.h.b16 %v80
    %v101 = vunpack.c.l.b16 %v81
    %v102 = vunpack.c.h.b16 %v81
    %v103 = vunpack.c.l.b16 %v82
    %v104 = vunpack.c.h.b16 %v82
    %v105 = vunpack.c.l.b16 %v83
    %v106 = vunpack.c.h.b16 %v83
    %v107 = vunpack.c.l.b16 %v84
    %v108 = vunpack.c.h.b16 %v84
    %v109 = vpack.c.b16 %v95, %v93
    %v110 = vpack.c.b16 %v96, %v94
    %v111 = vpack.c.b16 %v99, %v97
    %v112 = vpack.c.b16 %v100, %v98
    %v113 = vpack.c.b16 %v103, %v101
    %v114 = vpack.c.b16 %v104, %v102
    %v115 = vpack.c.b16 %v107, %v105
    %v116 = vpack.c.b16 %v108, %v106
    %vm125 = vcmask 523264
    %v127 = vsel %vm125, 0, 0
    %129 = vmatpush.bf16.msra.mxu0 0
    %130 = vmatpush.bf16.msra.mxu0 0
    %131 = vmatpush.bf16.msra.mxu0 0
    %132 = vmatpush.bf16.msra.mxu0 0
    %133 = vmatpush.bf16.msra.mxu0 %v115
    %134 = vmatpush.bf16.msra.mxu0 %v113
    %135 = vmatpush.bf16.msra.mxu0 %v111
    %136 = vmatpush.bf16.msra.mxu0 %v109
    %137 = vmatmul.bf16.gmra.mxu0 %v127
    %v138 = vpop.f32.mrf.mxu0
    %v139 = vadd.f32 0.0, %v138
    %v140 = vpop.f32.mrf.mxu0
    %141 = vdwg.mxu0
    %142 = vmatpush.bf16.msra.mxu0 0
    %143 = vmatpush.bf16.msra.mxu0 0
    %144 = vmatpush.bf16.msra.mxu0 0
    %145 = vmatpush.bf16.msra.mxu0 0
    %146 = vmatpush.bf16.msra.mxu0 %v116
    %147 = vmatpush.bf16.msra.mxu0 %v114
    %148 = vmatpush.bf16.msra.mxu0 %v112
    %149 = vmatpush.bf16.msra.mxu0 %v110
    %150 = vmatmul.bf16.gmra.mxu0 %v127
    %v151 = vpop.f32.mrf.mxu0
    %v152 = vadd.f32 0.0, %v151
    %v153 = vpop.f32.mrf.mxu0
    %154 = vdwg.mxu0
    %v155 = vadd.f32 %v75, %v139
    %v156 = vadd.f32 %v76, %v152
    %v158 = vperm.slane %v62, 0
    %v159 = vperm.slane %v62, 1
    %v162 = vadd.f32 %v155, %v158
    %v163 = vadd.f32 %v156, %v159
    %v164 = vxor.u32 %v162, 2147483648
    %v165 = vxor.u32 %v163, 2147483648
    %v166 = vmul.f32 %v164, 1.442695
    %v167 = vpow.pop %v166
    %v168 = vmul.f32 %v165, 1.442695
    %v169 = vpow.pop %v168
    %v170 = vadd.f32 %v167, 1.0
    %v171 = vadd.f32 %v169, 1.0
    %v172 = vrcp.pop %v170
    %v173 = vmul.f32 %v170, %v172
    %v174 = vsub.f32 1.0, %v173
    %v175 = vmul.f32 %v172, %v174
    %v176 = vadd.f32 %v172, %v175
    %vm177 = vweird.f32 %v170
    %vm178 = vweird.f32 %v172
    %vm179 = vmor %vm177, %vm178
    %v180 = vsel %vm179, %v172, %v176
    %v181 = vand.u32 2147483647, %v170
    %vm182 = vcmp.eq.f32.partialorder %v181, 8.507059e+37
    %v183 = vand.u32 %v170, 2147483648
    %v184 = vor.u32 1.1754944e-38, %v183
    %v185 = vsel %vm182, %v184, %v180
    %v186 = vmul.f32 1.0, %v185
    %v187 = vrcp.pop %v171
    %v188 = vmul.f32 %v171, %v187
    %v189 = vsub.f32 1.0, %v188
    %v190 = vmul.f32 %v187, %v189
    %v191 = vadd.f32 %v187, %v190
    %vm192 = vweird.f32 %v171
    %vm193 = vweird.f32 %v187
    %vm194 = vmor %vm192, %vm193
    %v195 = vsel %vm194, %v187, %v191
    %v196 = vand.u32 2147483647, %v171
    %vm197 = vcmp.eq.f32.partialorder %v196, 8.507059e+37
    %v198 = vand.u32 %v171, 2147483648
    %v199 = vor.u32 1.1754944e-38, %v198
    %v200 = vsel %vm197, %v199, %v195
    %v201 = vmul.f32 1.0, %v200
    %v202 = vtanh.pop %v163
    %v203 = vmul.f32 %v186, 0.0
    %v204 = vmul.f32 %v186, %v202
    %206 = vrot.lane.b32.xlu0 %v204, 64
    %v207 = vpop.permute.xlu0 %206
    %v209 = vadd.f32 %v203, %v207
    %v210 = vtanh.pop %v209
    %v211 = vmul.f32 %v201, %v210
    %212 = vset.pattern.permute.xlu0 1
    %213 = vperm.xlu0 %212, %v63
    %v214 = vpop.permute.xlu0 %213
    %v216 = vmul.f32 %v214, %v71
    %v217 = vmul.f32 %v214, %v72
    %v218 = vpack.c.bf16 %v211, %v211
    %220 = vrot.lane.b32.xlu0 %v218, 64
    %v221 = vpop.permute.xlu0 %220
    %v223 = vsel %vm125, %v221, 0
    %225 = vmatpush.bf16.msra.mxu0 0
    %226 = vmatpush.bf16.msra.mxu0 0
    %227 = vmatpush.bf16.msra.mxu0 0
    %228 = vmatpush.bf16.msra.mxu0 0
    %229 = vmatpush.bf16.msra.mxu0 %v115
    %230 = vmatpush.bf16.msra.mxu0 %v113
    %231 = vmatpush.bf16.msra.mxu0 %v111
    %232 = vmatpush.bf16.msra.mxu0 %v109
    %233 = vmatmul.bf16.gmra.mxu0 %v223
    %v234 = vpop.f32.mrf.mxu0
    %v235 = vadd.f32 0.0, %v234
    %v236 = vpop.f32.mrf.mxu0
    %237 = vdwg.mxu0
    %238 = vmatpush.bf16.msra.mxu0 0
    %239 = vmatpush.bf16.msra.mxu0 0
    %240 = vmatpush.bf16.msra.mxu0 0
    %241 = vmatpush.bf16.msra.mxu0 0
    %242 = vmatpush.bf16.msra.mxu0 %v116
    %243 = vmatpush.bf16.msra.mxu0 %v114
    %244 = vmatpush.bf16.msra.mxu0 %v112
    %245 = vmatpush.bf16.msra.mxu0 %v110
    %246 = vmatmul.bf16.gmra.mxu0 %v223
    %v247 = vpop.f32.mrf.mxu0
    %v248 = vadd.f32 0.0, %v247
    %v249 = vpop.f32.mrf.mxu0
    %250 = vdwg.mxu0
    %v251 = vadd.f32 %v216, %v235
    %v252 = vadd.f32 %v217, %v248
    %v253 = vadd.f32 %v251, %v158
    %v254 = vadd.f32 %v252, %v159
    %v255 = vxor.u32 %v253, 2147483648
    %v256 = vxor.u32 %v254, 2147483648
    %v257 = vmul.f32 %v255, 1.442695
    %v258 = vpow.pop %v257
    %v259 = vmul.f32 %v256, 1.442695
    %v260 = vpow.pop %v259
    %v261 = vadd.f32 %v258, 1.0
    %v262 = vadd.f32 %v260, 1.0
    %v263 = vrcp.pop %v261
    %v264 = vmul.f32 %v261, %v263
    %v265 = vsub.f32 1.0, %v264
    %v266 = vmul.f32 %v263, %v265
    %v267 = vadd.f32 %v263, %v266
    %vm268 = vweird.f32 %v261
    %vm269 = vweird.f32 %v263
    %vm270 = vmor %vm268, %vm269
    %v271 = vsel %vm270, %v263, %v267
    %v272 = vand.u32 2147483647, %v261
    %vm273 = vcmp.eq.f32.partialorder %v272, 8.507059e+37
    %v274 = vand.u32 %v261, 2147483648
    %v275 = vor.u32 1.1754944e-38, %v274
    %v276 = vsel %vm273, %v275, %v271
    %v277 = vmul.f32 1.0, %v276
    %v278 = vrcp.pop %v262
    %v279 = vmul.f32 %v262, %v278
    %v280 = vsub.f32 1.0, %v279
    %v281 = vmul.f32 %v278, %v280
    %v282 = vadd.f32 %v278, %v281
    %vm283 = vweird.f32 %v262
    %vm284 = vweird.f32 %v278
    %vm285 = vmor %vm283, %vm284
    %v286 = vsel %vm285, %v278, %v282
    %v287 = vand.u32 2147483647, %v262
    %vm288 = vcmp.eq.f32.partialorder %v287, 8.507059e+37
    %v289 = vand.u32 %v262, 2147483648
    %v290 = vor.u32 1.1754944e-38, %v289
    %v291 = vsel %vm288, %v290, %v286
    %v292 = vmul.f32 1.0, %v291
    %v293 = vtanh.pop %v254
    %v294 = vmul.f32 %v277, %v209
    %v295 = vmul.f32 %v277, %v293
    %297 = vrot.lane.b32.xlu0 %v295, 64
    %v298 = vpop.permute.xlu0 %297
    %v300 = vadd.f32 %v294, %v298
    %v301 = vtanh.pop %v300
    %v302 = vmul.f32 %v292, %v301
    %303 = vset.pattern.permute.xlu0 2
    %304 = vperm.xlu0 %303, %v63
    %v305 = vpop.permute.xlu0 %304
    %v307 = vmul.f32 %v305, %v71
    %v308 = vmul.f32 %v305, %v72
    %v309 = vpack.c.bf16 %v302, %v302
    %311 = vrot.lane.b32.xlu0 %v309, 64
    %v312 = vpop.permute.xlu0 %311
    %v314 = vsel %vm125, %v312, 0
    %316 = vmatpush.bf16.msra.mxu0 0
    %317 = vmatpush.bf16.msra.mxu0 0
    %318 = vmatpush.bf16.msra.mxu0 0
    %319 = vmatpush.bf16.msra.mxu0 0
    %320 = vmatpush.bf16.msra.mxu0 %v115
    %321 = vmatpush.bf16.msra.mxu0 %v113
    %322 = vmatpush.bf16.msra.mxu0 %v111
    %323 = vmatpush.bf16.msra.mxu0 %v109
    %324 = vmatmul.bf16.gmra.mxu0 %v314
    %v325 = vpop.f32.mrf.mxu0
    %v326 = vadd.f32 0.0, %v325
    %v327 = vpop.f32.mrf.mxu0
    %328 = vdwg.mxu0
    %329 = vmatpush.bf16.msra.mxu0 0
    %330 = vmatpush.bf16.msra.mxu0 0
    %331 = vmatpush.bf16.msra.mxu0 0
    %332 = vmatpush.bf16.msra.mxu0 0
    %333 = vmatpush.bf16.msra.mxu0 %v116
    %334 = vmatpush.bf16.msra.mxu0 %v114
    %335 = vmatpush.bf16.msra.mxu0 %v112
    %336 = vmatpush.bf16.msra.mxu0 %v110
    %337 = vmatmul.bf16.gmra.mxu0 %v314
    %v338 = vpop.f32.mrf.mxu0
    %v339 = vadd.f32 0.0, %v338
    %v340 = vpop.f32.mrf.mxu0
    %341 = vdwg.mxu0
    %v342 = vadd.f32 %v307, %v326
    %v343 = vadd.f32 %v308, %v339
    %v344 = vadd.f32 %v342, %v158
    %v345 = vadd.f32 %v343, %v159
    %v346 = vxor.u32 %v344, 2147483648
    %v347 = vxor.u32 %v345, 2147483648
    %v348 = vmul.f32 %v346, 1.442695
    %v349 = vpow.pop %v348
    %v350 = vmul.f32 %v347, 1.442695
    %v351 = vpow.pop %v350
    %v352 = vadd.f32 %v349, 1.0
    %v353 = vadd.f32 %v351, 1.0
    %v354 = vrcp.pop %v352
    %v355 = vmul.f32 %v352, %v354
    %v356 = vsub.f32 1.0, %v355
    %v357 = vmul.f32 %v354, %v356
    %v358 = vadd.f32 %v354, %v357
    %vm359 = vweird.f32 %v352
    %vm360 = vweird.f32 %v354
    %vm361 = vmor %vm359, %vm360
    %v362 = vsel %vm361, %v354, %v358
    %v363 = vand.u32 2147483647, %v352
    %vm364 = vcmp.eq.f32.partialorder %v363, 8.507059e+37
    %v365 = vand.u32 %v352, 2147483648
    %v366 = vor.u32 1.1754944e-38, %v365
    %v367 = vsel %vm364, %v366, %v362
    %v368 = vmul.f32 1.0, %v367
    %v369 = vrcp.pop %v353
    %v370 = vmul.f32 %v353, %v369
    %v371 = vsub.f32 1.0, %v370
    %v372 = vmul.f32 %v369, %v371
    %v373 = vadd.f32 %v369, %v372
    %vm374 = vweird.f32 %v353
    %vm375 = vweird.f32 %v369
    %vm376 = vmor %vm374, %vm375
    %v377 = vsel %vm376, %v369, %v373
    %v378 = vand.u32 2147483647, %v353
    %vm379 = vcmp.eq.f32.partialorder %v378, 8.507059e+37
    %v380 = vand.u32 %v353, 2147483648
    %v381 = vor.u32 1.1754944e-38, %v380
    %v382 = vsel %vm379, %v381, %v377
    %v383 = vmul.f32 1.0, %v382
    %v384 = vtanh.pop %v345
    %v385 = vmul.f32 %v368, %v300
    %v386 = vmul.f32 %v368, %v384
    %388 = vrot.lane.b32.xlu0 %v386, 64
    %v389 = vpop.permute.xlu0 %388
    %v391 = vadd.f32 %v385, %v389
    %v392 = vtanh.pop %v391
    %v393 = vmul.f32 %v383, %v392
    %394 = vset.pattern.permute.xlu0 3
    %395 = vperm.xlu0 %394, %v63
    %v396 = vpop.permute.xlu0 %395
    %v398 = vmul.f32 %v396, %v71
    %v399 = vmul.f32 %v396, %v72
    %v400 = vpack.c.bf16 %v393, %v393
    %402 = vrot.lane.b32.xlu0 %v400, 64
    %v403 = vpop.permute.xlu0 %402
    %v405 = vsel %vm125, %v403, 0
    %407 = vmatpush.bf16.msra.mxu0 0
    %408 = vmatpush.bf16.msra.mxu0 0
    %409 = vmatpush.bf16.msra.mxu0 0
    %410 = vmatpush.bf16.msra.mxu0 0
    %411 = vmatpush.bf16.msra.mxu0 %v115
    %412 = vmatpush.bf16.msra.mxu0 %v113
    %413 = vmatpush.bf16.msra.mxu0 %v111
    %414 = vmatpush.bf16.msra.mxu0 %v109
    %415 = vmatmul.bf16.gmra.mxu0 %v405
    %v416 = vpop.f32.mrf.mxu0
    %v417 = vadd.f32 0.0, %v416
    %v418 = vpop.f32.mrf.mxu0
    %419 = vdwg.mxu0
    %420 = vmatpush.bf16.msra.mxu0 0
    %421 = vmatpush.bf16.msra.mxu0 0
    %422 = vmatpush.bf16.msra.mxu0 0
    %423 = vmatpush.bf16.msra.mxu0 0
    %424 = vmatpush.bf16.msra.mxu0 %v116
    %425 = vmatpush.bf16.msra.mxu0 %v114
    %426 = vmatpush.bf16.msra.mxu0 %v112
    %427 = vmatpush.bf16.msra.mxu0 %v110
    %428 = vmatmul.bf16.gmra.mxu0 %v405
    %v429 = vpop.f32.mrf.mxu0
    %v430 = vadd.f32 0.0, %v429
    %v431 = vpop.f32.mrf.mxu0
    %432 = vdwg.mxu0
    %v433 = vadd.f32 %v398, %v417
    %v434 = vadd.f32 %v399, %v430
    %v435 = vadd.f32 %v433, %v158
    %v436 = vadd.f32 %v434, %v159
    %v437 = vxor.u32 %v435, 2147483648
    %v438 = vxor.u32 %v436, 2147483648
    %v439 = vmul.f32 %v437, 1.442695
    %v440 = vpow.pop %v439
    %v441 = vmul.f32 %v438, 1.442695
    %v442 = vpow.pop %v441
    %v443 = vadd.f32 %v440, 1.0
    %v444 = vadd.f32 %v442, 1.0
    %v445 = vrcp.pop %v443
    %v446 = vmul.f32 %v443, %v445
    %v447 = vsub.f32 1.0, %v446
    %v448 = vmul.f32 %v445, %v447
    %v449 = vadd.f32 %v445, %v448
    %vm450 = vweird.f32 %v443
    %vm451 = vweird.f32 %v445
    %vm452 = vmor %vm450, %vm451
    %v453 = vsel %vm452, %v445, %v449
    %v454 = vand.u32 2147483647, %v443
    %vm455 = vcmp.eq.f32.partialorder %v454, 8.507059e+37
    %v456 = vand.u32 %v443, 2147483648
    %v457 = vor.u32 1.1754944e-38, %v456
    %v458 = vsel %vm455, %v457, %v453
    %v459 = vmul.f32 1.0, %v458
    %v460 = vrcp.pop %v444
    %v461 = vmul.f32 %v444, %v460
    %v462 = vsub.f32 1.0, %v461
    %v463 = vmul.f32 %v460, %v462
    %v464 = vadd.f32 %v460, %v463
    %vm465 = vweird.f32 %v444
    %vm466 = vweird.f32 %v460
    %vm467 = vmor %vm465, %vm466
    %v468 = vsel %vm467, %v460, %v464
    %v469 = vand.u32 2147483647, %v444
    %vm470 = vcmp.eq.f32.partialorder %v469, 8.507059e+37
    %v471 = vand.u32 %v444, 2147483648
    %v472 = vor.u32 1.1754944e-38, %v471
    %v473 = vsel %vm470, %v472, %v468
    %v474 = vmul.f32 1.0, %v473
    %v475 = vtanh.pop %v436
    %v476 = vmul.f32 %v459, %v391
    %v477 = vmul.f32 %v459, %v475
    %479 = vrot.lane.b32.xlu0 %v477, 64
    %v480 = vpop.permute.xlu0 %479
    %v482 = vadd.f32 %v476, %v480
    %v483 = vtanh.pop %v482
    %v484 = vmul.f32 %v474, %v483
    %485 = vset.pattern.permute.xlu0 4
    %486 = vperm.xlu0 %485, %v63
    %v487 = vpop.permute.xlu0 %486
    %v489 = vmul.f32 %v487, %v71
    %v490 = vmul.f32 %v487, %v72
    %v491 = vpack.c.bf16 %v484, %v484
    %493 = vrot.lane.b32.xlu0 %v491, 64
    %v494 = vpop.permute.xlu0 %493
    %v496 = vsel %vm125, %v494, 0
    %498 = vmatpush.bf16.msra.mxu0 0
    %499 = vmatpush.bf16.msra.mxu0 0
    %500 = vmatpush.bf16.msra.mxu0 0
    %501 = vmatpush.bf16.msra.mxu0 0
    %502 = vmatpush.bf16.msra.mxu0 %v115
    %503 = vmatpush.bf16.msra.mxu0 %v113
    %504 = vmatpush.bf16.msra.mxu0 %v111
    %505 = vmatpush.bf16.msra.mxu0 %v109
    %506 = vmatmul.bf16.gmra.mxu0 %v496
    %v507 = vpop.f32.mrf.mxu0
    %v508 = vadd.f32 0.0, %v507
    %v509 = vpop.f32.mrf.mxu0
    %510 = vdwg.mxu0
    %511 = vmatpush.bf16.msra.mxu0 0
    %512 = vmatpush.bf16.msra.mxu0 0
    %513 = vmatpush.bf16.msra.mxu0 0
    %514 = vmatpush.bf16.msra.mxu0 0
    %515 = vmatpush.bf16.msra.mxu0 %v116
    %516 = vmatpush.bf16.msra.mxu0 %v114
    %517 = vmatpush.bf16.msra.mxu0 %v112
    %518 = vmatpush.bf16.msra.mxu0 %v110
    %519 = vmatmul.bf16.gmra.mxu0 %v496
    %v520 = vpop.f32.mrf.mxu0
    %v521 = vadd.f32 0.0, %v520
    %v522 = vpop.f32.mrf.mxu0
    %523 = vdwg.mxu0
    %v524 = vadd.f32 %v489, %v508
    %v525 = vadd.f32 %v490, %v521
    %v526 = vadd.f32 %v524, %v158
    %v527 = vadd.f32 %v525, %v159
    %v528 = vxor.u32 %v526, 2147483648
    %v529 = vxor.u32 %v527, 2147483648
    %v530 = vmul.f32 %v528, 1.442695
    %v531 = vpow.pop %v530
    %v532 = vmul.f32 %v529, 1.442695
    %v533 = vpow.pop %v532
    %v534 = vadd.f32 %v531, 1.0
    %v535 = vadd.f32 %v533, 1.0
    %v536 = vrcp.pop %v534
    %v537 = vmul.f32 %v534, %v536
    %v538 = vsub.f32 1.0, %v537
    %v539 = vmul.f32 %v536, %v538
    %v540 = vadd.f32 %v536, %v539
    %vm541 = vweird.f32 %v534
    %vm542 = vweird.f32 %v536
    %vm543 = vmor %vm541, %vm542
    %v544 = vsel %vm543, %v536, %v540
    %v545 = vand.u32 2147483647, %v534
    %vm546 = vcmp.eq.f32.partialorder %v545, 8.507059e+37
    %v547 = vand.u32 %v534, 2147483648
    %v548 = vor.u32 1.1754944e-38, %v547
    %v549 = vsel %vm546, %v548, %v544
    %v550 = vmul.f32 1.0, %v549
    %v551 = vrcp.pop %v535
    %v552 = vmul.f32 %v535, %v551
    %v553 = vsub.f32 1.0, %v552
    %v554 = vmul.f32 %v551, %v553
    %v555 = vadd.f32 %v551, %v554
    %vm556 = vweird.f32 %v535
    %vm557 = vweird.f32 %v551
    %vm558 = vmor %vm556, %vm557
    %v559 = vsel %vm558, %v551, %v555
    %v560 = vand.u32 2147483647, %v535
    %vm561 = vcmp.eq.f32.partialorder %v560, 8.507059e+37
    %v562 = vand.u32 %v535, 2147483648
    %v563 = vor.u32 1.1754944e-38, %v562
    %v564 = vsel %vm561, %v563, %v559
    %v565 = vmul.f32 1.0, %v564
    %v566 = vtanh.pop %v527
    %v567 = vmul.f32 %v550, %v482
    %v568 = vmul.f32 %v550, %v566
    %570 = vrot.lane.b32.xlu0 %v568, 64
    %v571 = vpop.permute.xlu0 %570
    %v573 = vadd.f32 %v567, %v571
    %v574 = vtanh.pop %v573
    %v575 = vmul.f32 %v565, %v574
    %576 = vset.pattern.permute.xlu0 5
    %577 = vperm.xlu0 %576, %v63
    %v578 = vpop.permute.xlu0 %577
    %v580 = vmul.f32 %v578, %v71
    %v581 = vmul.f32 %v578, %v72
    %v582 = vpack.c.bf16 %v575, %v575
    %584 = vrot.lane.b32.xlu0 %v582, 64
    %v585 = vpop.permute.xlu0 %584
    %v587 = vsel %vm125, %v585, 0
    %589 = vmatpush.bf16.msra.mxu0 0
    %590 = vmatpush.bf16.msra.mxu0 0
    %591 = vmatpush.bf16.msra.mxu0 0
    %592 = vmatpush.bf16.msra.mxu0 0
    %593 = vmatpush.bf16.msra.mxu0 %v115
    %594 = vmatpush.bf16.msra.mxu0 %v113
    %595 = vmatpush.bf16.msra.mxu0 %v111
    %596 = vmatpush.bf16.msra.mxu0 %v109
    %597 = vmatmul.bf16.gmra.mxu0 %v587
    %v598 = vpop.f32.mrf.mxu0
    %v599 = vadd.f32 0.0, %v598
    %v600 = vpop.f32.mrf.mxu0
    %601 = vdwg.mxu0
    %602 = vmatpush.bf16.msra.mxu0 0
    %603 = vmatpush.bf16.msra.mxu0 0
    %604 = vmatpush.bf16.msra.mxu0 0
    %605 = vmatpush.bf16.msra.mxu0 0
    %606 = vmatpush.bf16.msra.mxu0 %v116
    %607 = vmatpush.bf16.msra.mxu0 %v114
    %608 = vmatpush.bf16.msra.mxu0 %v112
    %609 = vmatpush.bf16.msra.mxu0 %v110
    %610 = vmatmul.bf16.gmra.mxu0 %v587
    %v611 = vpop.f32.mrf.mxu0
    %v612 = vadd.f32 0.0, %v611
    %v613 = vpop.f32.mrf.mxu0
    %614 = vdwg.mxu0
    %v615 = vadd.f32 %v580, %v599
    %v616 = vadd.f32 %v581, %v612
    %v617 = vadd.f32 %v615, %v158
    %v618 = vadd.f32 %v616, %v159
    %v619 = vxor.u32 %v617, 2147483648
    %v620 = vxor.u32 %v618, 2147483648
    %v621 = vmul.f32 %v619, 1.442695
    %v622 = vpow.pop %v621
    %v623 = vmul.f32 %v620, 1.442695
    %v624 = vpow.pop %v623
    %v625 = vadd.f32 %v622, 1.0
    %v626 = vadd.f32 %v624, 1.0
    %v627 = vrcp.pop %v625
    %v628 = vmul.f32 %v625, %v627
    %v629 = vsub.f32 1.0, %v628
    %v630 = vmul.f32 %v627, %v629
    %v631 = vadd.f32 %v627, %v630
    %vm632 = vweird.f32 %v625
    %vm633 = vweird.f32 %v627
    %vm634 = vmor %vm632, %vm633
    %v635 = vsel %vm634, %v627, %v631
    %v636 = vand.u32 2147483647, %v625
    %vm637 = vcmp.eq.f32.partialorder %v636, 8.507059e+37
    %v638 = vand.u32 %v625, 2147483648
    %v639 = vor.u32 1.1754944e-38, %v638
    %v640 = vsel %vm637, %v639, %v635
    %v641 = vmul.f32 1.0, %v640
    %v642 = vrcp.pop %v626
    %v643 = vmul.f32 %v626, %v642
    %v644 = vsub.f32 1.0, %v643
    %v645 = vmul.f32 %v642, %v644
    %v646 = vadd.f32 %v642, %v645
    %vm647 = vweird.f32 %v626
    %vm648 = vweird.f32 %v642
    %vm649 = vmor %vm647, %vm648
    %v650 = vsel %vm649, %v642, %v646
    %v651 = vand.u32 2147483647, %v626
    %vm652 = vcmp.eq.f32.partialorder %v651, 8.507059e+37
    %v653 = vand.u32 %v626, 2147483648
    %v654 = vor.u32 1.1754944e-38, %v653
    %v655 = vsel %vm652, %v654, %v650
    %v656 = vmul.f32 1.0, %v655
    %v657 = vtanh.pop %v618
    %v658 = vmul.f32 %v641, %v573
    %v659 = vmul.f32 %v641, %v657
    %661 = vrot.lane.b32.xlu0 %v659, 64
    %v662 = vpop.permute.xlu0 %661
    %v664 = vadd.f32 %v658, %v662
    %v665 = vtanh.pop %v664
    %v666 = vmul.f32 %v656, %v665
    %667 = vset.pattern.permute.xlu0 6
    %668 = vperm.xlu0 %667, %v63
    %v669 = vpop.permute.xlu0 %668
    %v671 = vmul.f32 %v669, %v71
    %v672 = vmul.f32 %v669, %v72
    %v673 = vpack.c.bf16 %v666, %v666
    %675 = vrot.lane.b32.xlu0 %v673, 64
    %v676 = vpop.permute.xlu0 %675
    %v678 = vsel %vm125, %v676, 0
    %680 = vmatpush.bf16.msra.mxu0 0
    %681 = vmatpush.bf16.msra.mxu0 0
    %682 = vmatpush.bf16.msra.mxu0 0
    %683 = vmatpush.bf16.msra.mxu0 0
    %684 = vmatpush.bf16.msra.mxu0 %v115
    %685 = vmatpush.bf16.msra.mxu0 %v113
    %686 = vmatpush.bf16.msra.mxu0 %v111
    %687 = vmatpush.bf16.msra.mxu0 %v109
    %688 = vmatmul.bf16.gmra.mxu0 %v678
    %v689 = vpop.f32.mrf.mxu0
    %v690 = vadd.f32 0.0, %v689
    %v691 = vpop.f32.mrf.mxu0
    %692 = vdwg.mxu0
    %693 = vmatpush.bf16.msra.mxu0 0
    %694 = vmatpush.bf16.msra.mxu0 0
    %695 = vmatpush.bf16.msra.mxu0 0
    %696 = vmatpush.bf16.msra.mxu0 0
    %697 = vmatpush.bf16.msra.mxu0 %v116
    %698 = vmatpush.bf16.msra.mxu0 %v114
    %699 = vmatpush.bf16.msra.mxu0 %v112
    %700 = vmatpush.bf16.msra.mxu0 %v110
    %701 = vmatmul.bf16.gmra.mxu0 %v678
    %v702 = vpop.f32.mrf.mxu0
    %v703 = vadd.f32 0.0, %v702
    %v704 = vpop.f32.mrf.mxu0
    %705 = vdwg.mxu0
    %v706 = vadd.f32 %v671, %v690
    %v707 = vadd.f32 %v672, %v703
    %v708 = vadd.f32 %v706, %v158
    %v709 = vadd.f32 %v707, %v159
    %v710 = vxor.u32 %v708, 2147483648
    %v711 = vxor.u32 %v709, 2147483648
    %v712 = vmul.f32 %v710, 1.442695
    %v713 = vpow.pop %v712
    %v714 = vmul.f32 %v711, 1.442695
    %v715 = vpow.pop %v714
    %v716 = vadd.f32 %v713, 1.0
    %v717 = vadd.f32 %v715, 1.0
    %v718 = vrcp.pop %v716
    %v719 = vmul.f32 %v716, %v718
    %v720 = vsub.f32 1.0, %v719
    %v721 = vmul.f32 %v718, %v720
    %v722 = vadd.f32 %v718, %v721
    %vm723 = vweird.f32 %v716
    %vm724 = vweird.f32 %v718
    %vm725 = vmor %vm723, %vm724
    %v726 = vsel %vm725, %v718, %v722
    %v727 = vand.u32 2147483647, %v716
    %vm728 = vcmp.eq.f32.partialorder %v727, 8.507059e+37
    %v729 = vand.u32 %v716, 2147483648
    %v730 = vor.u32 1.1754944e-38, %v729
    %v731 = vsel %vm728, %v730, %v726
    %v732 = vmul.f32 1.0, %v731
    %v733 = vrcp.pop %v717
    %v734 = vmul.f32 %v717, %v733
    %v735 = vsub.f32 1.0, %v734
    %v736 = vmul.f32 %v733, %v735
    %v737 = vadd.f32 %v733, %v736
    %vm738 = vweird.f32 %v717
    %vm739 = vweird.f32 %v733
    %vm740 = vmor %vm738, %vm739
    %v741 = vsel %vm740, %v733, %v737
    %v742 = vand.u32 2147483647, %v717
    %vm743 = vcmp.eq.f32.partialorder %v742, 8.507059e+37
    %v744 = vand.u32 %v717, 2147483648
    %v745 = vor.u32 1.1754944e-38, %v744
    %v746 = vsel %vm743, %v745, %v741
    %v747 = vmul.f32 1.0, %v746
    %v748 = vtanh.pop %v709
    %v749 = vmul.f32 %v732, %v664
    %v750 = vmul.f32 %v732, %v748
    %752 = vrot.lane.b32.xlu0 %v750, 64
    %v753 = vpop.permute.xlu0 %752
    %v755 = vadd.f32 %v749, %v753
    %v756 = vtanh.pop %v755
    %v757 = vmul.f32 %v747, %v756
    %758 = vset.pattern.permute.xlu0 7
    %759 = vperm.xlu0 %758, %v63
    %v760 = vpop.permute.xlu0 %759
    %v762 = vmul.f32 %v760, %v71
    %v763 = vmul.f32 %v760, %v72
    %v764 = vpack.c.bf16 %v757, %v757
    %766 = vrot.lane.b32.xlu0 %v764, 64
    %v767 = vpop.permute.xlu0 %766
    %v769 = vsel %vm125, %v767, 0
    %771 = vmatpush.bf16.msra.mxu0 0
    %772 = vmatpush.bf16.msra.mxu0 0
    %773 = vmatpush.bf16.msra.mxu0 0
    %774 = vmatpush.bf16.msra.mxu0 0
    %775 = vmatpush.bf16.msra.mxu0 %v115
    %776 = vmatpush.bf16.msra.mxu0 %v113
    %777 = vmatpush.bf16.msra.mxu0 %v111
    %778 = vmatpush.bf16.msra.mxu0 %v109
    %779 = vmatmul.bf16.gmra.mxu0 %v769
    %v780 = vpop.f32.mrf.mxu0
    %v781 = vadd.f32 0.0, %v780
    %v782 = vpop.f32.mrf.mxu0
    %783 = vdwg.mxu0
    %784 = vmatpush.bf16.msra.mxu0 0
    %785 = vmatpush.bf16.msra.mxu0 0
    %786 = vmatpush.bf16.msra.mxu0 0
    %787 = vmatpush.bf16.msra.mxu0 0
    %788 = vmatpush.bf16.msra.mxu0 %v116
    %789 = vmatpush.bf16.msra.mxu0 %v114
    %790 = vmatpush.bf16.msra.mxu0 %v112
    %791 = vmatpush.bf16.msra.mxu0 %v110
    %792 = vmatmul.bf16.gmra.mxu0 %v769
    %v793 = vpop.f32.mrf.mxu0
    %v794 = vadd.f32 0.0, %v793
    %v795 = vpop.f32.mrf.mxu0
    %796 = vdwg.mxu0
    %v797 = vadd.f32 %v762, %v781
    %v798 = vadd.f32 %v763, %v794
    %v799 = vadd.f32 %v797, %v158
    %v800 = vadd.f32 %v798, %v159
    %v801 = vxor.u32 %v799, 2147483648
    %v802 = vxor.u32 %v800, 2147483648
    %v803 = vmul.f32 %v801, 1.442695
    %v804 = vpow.pop %v803
    %v805 = vmul.f32 %v802, 1.442695
    %v806 = vpow.pop %v805
    %v807 = vadd.f32 %v804, 1.0
    %v808 = vadd.f32 %v806, 1.0
    %v809 = vrcp.pop %v807
    %v810 = vmul.f32 %v807, %v809
    %v811 = vsub.f32 1.0, %v810
    %v812 = vmul.f32 %v809, %v811
    %v813 = vadd.f32 %v809, %v812
    %vm814 = vweird.f32 %v807
    %vm815 = vweird.f32 %v809
    %vm816 = vmor %vm814, %vm815
    %v817 = vsel %vm816, %v809, %v813
    %v818 = vand.u32 2147483647, %v807
    %vm819 = vcmp.eq.f32.partialorder %v818, 8.507059e+37
    %v820 = vand.u32 %v807, 2147483648
    %v821 = vor.u32 1.1754944e-38, %v820
    %v822 = vsel %vm819, %v821, %v817
    %v823 = vmul.f32 1.0, %v822
    %v824 = vrcp.pop %v808
    %v825 = vmul.f32 %v808, %v824
    %v826 = vsub.f32 1.0, %v825
    %v827 = vmul.f32 %v824, %v826
    %v828 = vadd.f32 %v824, %v827
    %vm829 = vweird.f32 %v808
    %vm830 = vweird.f32 %v824
    %vm831 = vmor %vm829, %vm830
    %v832 = vsel %vm831, %v824, %v828
    %v833 = vand.u32 2147483647, %v808
    %vm834 = vcmp.eq.f32.partialorder %v833, 8.507059e+37
    %v835 = vand.u32 %v808, 2147483648
    %v836 = vor.u32 1.1754944e-38, %v835
    %v837 = vsel %vm834, %v836, %v832
    %v838 = vmul.f32 1.0, %v837
    %v839 = vtanh.pop %v800
    %v840 = vmul.f32 %v823, %v755
    %v841 = vmul.f32 %v823, %v839
    %843 = vrot.lane.b32.xlu0 %v841, 64
    %v844 = vpop.permute.xlu0 %843
    %v846 = vadd.f32 %v840, %v844
    %v847 = vtanh.pop %v846
    %v848 = vmul.f32 %v838, %v847
    %850 = vrot.lane.b32.xlu0 %v848, 64
    %v851 = vpop.permute.xlu0 %850
    %853 = vst.msk [vmem:[#allocation8] sm:$0xff] %vm125, %v851
    // Predicated region
    $region30: #{tpu_custom_call.1} parent=1 // pred_check
      _
    $region31: #{tpu_custom_call.1} parent=1 // pred_check_branch
      %855 = sbr.rel (0) target = $region33
    $region32: #{tpu_custom_call.1} parent=1 // pred_region
      %857 = vsyncadd [#allocation4], 0
      %s859 = sshll.u32 [#allocation8], 4
      %s860 = int_to_ptr.vmem [resolvable:$true] %s859
      %s861 = sshll.u32 %s4, 4
      %s862 = int_to_ptr.hbm [resolvable:$true] %s861
      %864 = dma.vmem_to_hbm [thread:$0]  %s860, 128, %s862, [#allocation4]
    $region33: #{tpu_custom_call.1} parent=1 // pred_fallthru
      _
    // Predicated region
    $region34: #{tpu_custom_call.1} parent=1 // pred_check
      _
    $region35: #{tpu_custom_call.1} parent=1 // pred_check_branch
      %866 = sbr.rel (0) target = $region37
    $region36: #{tpu_custom_call.1} parent=1 // pred_region
      %868 = dma.done [#allocation4], 128
    $region37: #{tpu_custom_call.1} parent=1 // pred_fallthru
      _
    %869 = vsyncpa [#allocation3], 1
    %870 = vsyncpa [#allocation6], 1
    %871 = vsyncpa [#allocation4], 1

</llo_original>
